<compile_context>
chip_gen: v6e
topology: v6e:2x2x1
jax: 0.10.0
libtpu: 0.0.40
codegen_flags: <defaults>
</compile_context>

<pallas_src>
import jax
import jax.numpy as jnp
from jax.experimental import pallas as pl
from jax.experimental.pallas import tpu as pltpu

COND_DIM = 822
H1, H2, H3 = 64, 128, 64
OUT_DIM = 3


def generator_kernel(noise_ref, cond_ref, w1n_ref, w1c_ref, w2_ref, w3_ref,
                     w4_ref, bias_ref, o_ref):
    """One batch tile of the whole MLP; weights stay resident in VMEM."""
    noise = noise_ref[...].astype(jnp.bfloat16)
    cond = cond_ref[...].astype(jnp.bfloat16)

    # Layer 1: torch.cat fused into a split matmul (noise part + conditions part).
    h = jnp.dot(noise, w1n_ref[...], preferred_element_type=jnp.float32)
    h = h + jnp.dot(cond, w1c_ref[...], preferred_element_type=jnp.float32)
    h = jnp.maximum(h + bias_ref[0:1, :H1], 0.0)                  # ReLU in f32

    # Layer 2
    h = jnp.dot(h.astype(jnp.bfloat16), w2_ref[...],
                preferred_element_type=jnp.float32)
    h = jnp.maximum(h + bias_ref[1:2, :H2], 0.0)

    # Layer 3
    h = jnp.dot(h.astype(jnp.bfloat16), w3_ref[...],
                preferred_element_type=jnp.float32)
    h = jnp.maximum(h + bias_ref[2:3, :H3], 0.0)

    # Output layer + Sigmoid
    logits = jnp.dot(h.astype(jnp.bfloat16), w4_ref[...],
                     preferred_element_type=jnp.float32)
    logits = logits + bias_ref[3:4, :OUT_DIM]
    y = jax.nn.sigmoid(logits)

    # Per-channel affine rescaling from the PyTorch forward:
    #   ch0: *1.1 + 0.2,  ch1: *690 + 10,  ch2: *13 + 15
    col = jax.lax.broadcasted_iota(jnp.int32, y.shape, dimension=1)
    scale = jnp.where(col == 0, 1.1, jnp.where(col == 1, 690.0, 13.0))
    shift = jnp.where(col == 0, 0.2, jnp.where(col == 1, 10.0, 15.0))
    o_ref[...] = (y * scale + shift).astype(o_ref.dtype)


def init_params(key, noise_dim):
    """PyTorch nn.Linear default init: U(-1/sqrt(fan_in), 1/sqrt(fan_in)).

    Weights stored as (in_features, out_features); input features are ordered
    [noise, conditions] to match torch.cat([noise, conditions], dim=1).
    """
    dims = [noise_dim + COND_DIM, H1, H2, H3, OUT_DIM]
    params = []
    for fan_in, fan_out in zip(dims[:-1], dims[1:]):
        key, kw, kb = jax.random.split(key, 3)
        bound = 1.0 / float(fan_in) ** 0.5
        w = jax.random.uniform(kw, (fan_in, fan_out), jnp.float32, -bound, bound)
        b = jax.random.uniform(kb, (1, fan_out), jnp.float32, -bound, bound)
        params.append((w, b))
    return params


def _prepare_kernel_params(params, noise_dim):
    """bf16 weights, W1 split at the noise/conditions boundary, biases packed."""
    (w1, b1), (w2, b2), (w3, b3), (w4, b4) = params
    weights = [
        w1[:noise_dim].astype(jnp.bfloat16),   # (nd, 64)   -- noise part of W1
        w1[noise_dim:].astype(jnp.bfloat16),   # (822, 64)  -- conditions part of W1
        w2.astype(jnp.bfloat16),               # (64, 128)
        w3.astype(jnp.bfloat16),               # (128, 64)
        w4.astype(jnp.bfloat16),               # (64, 3)
    ]
    # Coalesce the four tiny bias vectors into one zero-padded (4, 128) array
    # so they travel in a single DMA instead of four.
    bias_packed = jnp.zeros((4, 128), jnp.float32)
    for row, b in enumerate((b1, b2, b3, b4)):
        bias_packed = bias_packed.at[row, : b.shape[-1]].set(b.reshape(-1))
    return weights, bias_packed


def _round_up(x, m):
    return (x + m - 1) // m * m


@jax.jit
def generator_forward(noise, conditions, params):
    batch, noise_dim = noise.shape
    cond_dim = conditions.shape[1]
    weights, bias_packed = _prepare_kernel_params(params, noise_dim)
    w1n, w1c, w2, w3, w4 = weights

    # Batch tiling: a single tile for small batches, 256-row tiles otherwise.
    if batch <= 512:
        tm = _round_up(batch, 8)
    else:
        tm = 256
    b_pad = _round_up(batch, tm)
    if b_pad != batch:
        pad = ((0, b_pad - batch), (0, 0))
        noise = jnp.pad(noise, pad)
        conditions = jnp.pad(conditions, pad)
    grid = (b_pad // tm,)

    def act_spec(d):
        return pl.BlockSpec((tm, d), lambda i: (i, 0))

    def resident_spec(shape):
        # Constant block index -> stays VMEM-resident across all grid steps.
        return pl.BlockSpec(shape, lambda i: (0, 0))

    # Right-sized VMEM request: resident bf16 weights + double-buffered f32
    # activation tiles + headroom (v7x only has 64 MiB of VMEM per TC).
    weight_bytes = sum(int(w.size) * 2 for w in weights) + int(bias_packed.size) * 4
    tile_bytes = 2 * tm * (noise_dim + cond_dim + OUT_DIM) * 4
    vmem_limit = int(min(64 << 20, max(16 << 20, 4 * (weight_bytes + tile_bytes))))

    out = pl.pallas_call(
        generator_kernel,
        out_shape=jax.ShapeDtypeStruct((b_pad, OUT_DIM), jnp.float32),
        grid=grid,
        in_specs=[
            act_spec(noise_dim),
            act_spec(cond_dim),
            resident_spec(w1n.shape),
            resident_spec(w1c.shape),
            resident_spec(w2.shape),
            resident_spec(w3.shape),
            resident_spec(w4.shape),
            resident_spec(bias_packed.shape),
        ],
        out_specs=act_spec(OUT_DIM),
        compiler_params=pltpu.CompilerParams(
            dimension_semantics=("parallel",),
            vmem_limit_bytes=vmem_limit,
        ),
    )(noise, conditions, w1n, w1c, w2, w3, w4, bias_packed)

    return out[:batch]


def reference_forward(noise, conditions, params):
    """Pure-JAX reference using the same bf16-weight / f32-accumulate math."""
    h = jnp.concatenate([noise, conditions], axis=1)
    for i, (w, b) in enumerate(params):
        h = jnp.dot(h.astype(jnp.bfloat16), w.astype(jnp.bfloat16),
                    preferred_element_type=jnp.float32) + b
        if i < len(params) - 1:
            h = jnp.maximum(h, 0.0)
    y = jax.nn.sigmoid(h)
    scale = jnp.array([1.1, 690.0, 13.0], jnp.float32)
    shift = jnp.array([0.2, 10.0, 15.0], jnp.float32)
    return y * scale + shift


if __name__ == "__main__":
    key = jax.random.PRNGKey(0)
    k_params, k_noise, k_cond = jax.random.split(key, 3)

    noise_dim = 32
    batch = 8
    params = init_params(k_params, noise_dim)

    noise = jax.random.normal(k_noise, (batch, noise_dim), jnp.float32)
    conditions = jax.random.normal(k_cond, (batch, COND_DIM), jnp.float32)

    out = generator_forward(noise, conditions, params)
    out = jax.block_until_ready(out)

    ref = reference_forward(noise, conditions, params)
    assert out.shape == (batch, OUT_DIM), out.shape
    max_err = jnp.max(jnp.abs(out - ref))
    # Both sides use bf16 matmul operands with f32 accumulation; the *690 output
    # scale amplifies tiny accumulation-order differences, hence the tolerance.
    assert jnp.allclose(out, ref, atol=5e-2, rtol=1e-3), f"max abs err = {max_err}"
    print("KERNEL_OK")
</pallas_src>

<mosaic_0001>
module attributes {stable_mosaic.version = 11 : i64} {
  func.func @generator_kernel(%arg0: i32, %arg1: memref<8x32xf32, #tpu.memory_space<vmem>>, %arg2: memref<8x822xf32, #tpu.memory_space<vmem>>, %arg3: memref<32x64xbf16, #tpu.memory_space<vmem>>, %arg4: memref<822x64xbf16, #tpu.memory_space<vmem>>, %arg5: memref<64x128xbf16, #tpu.memory_space<vmem>>, %arg6: memref<128x64xbf16, #tpu.memory_space<vmem>>, %arg7: memref<64x3xbf16, #tpu.memory_space<vmem>>, %arg8: memref<4x128xf32, #tpu.memory_space<vmem>>, %arg9: memref<8x3xf32, #tpu.memory_space<vmem>>) attributes {dimension_semantics = [#tpu.dimension_semantics<parallel>], iteration_bounds = array<i64: 1>, scalar_prefetch = 0 : i64, scratch_operands = 0 : i64, tpu.core_type = #tpu.core_type<tc>, window_params = [{transform_indices = @transform_0, window_bounds = array<i64: 8, 32>}, {transform_indices = @transform_1, window_bounds = array<i64: 8, 822>}, {pipeline_mode = #tpu.pipeline_mode<synchronous>, transform_indices = @transform_2, window_bounds = array<i64: 32, 64>}, {pipeline_mode = #tpu.pipeline_mode<synchronous>, transform_indices = @transform_3, window_bounds = array<i64: 822, 64>}, {pipeline_mode = #tpu.pipeline_mode<synchronous>, transform_indices = @transform_4, window_bounds = array<i64: 64, 128>}, {pipeline_mode = #tpu.pipeline_mode<synchronous>, transform_indices = @transform_5, window_bounds = array<i64: 128, 64>}, {pipeline_mode = #tpu.pipeline_mode<synchronous>, transform_indices = @transform_6, window_bounds = array<i64: 64, 3>}, {pipeline_mode = #tpu.pipeline_mode<synchronous>, transform_indices = @transform_7, window_bounds = array<i64: 4, 128>}, {transform_indices = @transform_8, window_bounds = array<i64: 8, 3>}]} {
    %c0 = arith.constant 0 : index
    %c0_0 = arith.constant 0 : index
    %0 = vector.load %arg1[%c0, %c0_0] : memref<8x32xf32, #tpu.memory_space<vmem>>, vector<8x32xf32>
    %1 = arith.truncf %0 : vector<8x32xf32> to vector<8x32xbf16>
    %c0_1 = arith.constant 0 : index
    %c0_2 = arith.constant 0 : index
    %2 = vector.load %arg2[%c0_1, %c0_2] : memref<8x822xf32, #tpu.memory_space<vmem>>, vector<8x822xf32>
    %3 = arith.truncf %2 : vector<8x822xf32> to vector<8x822xbf16>
    %c0_3 = arith.constant 0 : index
    %c0_4 = arith.constant 0 : index
    %4 = vector.load %arg3[%c0_3, %c0_4] : memref<32x64xbf16, #tpu.memory_space<vmem>>, vector<32x64xbf16>
    %cst = arith.constant dense<0.000000e+00> : vector<8x64xf32>
    %5 = tpu.matmul %1, %4, %cst {dimension_numbers = #tpu.dot_dimension_numbers<[1], [0], [0], [1], [0, 0, 1, 1], [], []>} : vector<8x32xbf16>, vector<32x64xbf16>, vector<8x64xf32> -> vector<8x64xf32>
    %c0_5 = arith.constant 0 : index
    %c0_6 = arith.constant 0 : index
    %6 = vector.load %arg4[%c0_5, %c0_6] : memref<822x64xbf16, #tpu.memory_space<vmem>>, vector<822x64xbf16>
    %cst_7 = arith.constant dense<0.000000e+00> : vector<8x64xf32>
    %7 = tpu.matmul %3, %6, %cst_7 {dimension_numbers = #tpu.dot_dimension_numbers<[1], [0], [0], [1], [0, 0, 1, 1], [], []>} : vector<8x822xbf16>, vector<822x64xbf16>, vector<8x64xf32> -> vector<8x64xf32>
    %8 = arith.addf %5, %7 : vector<8x64xf32>
    %c0_8 = arith.constant 0 : index
    %c0_9 = arith.constant 0 : index
    %9 = vector.load %arg8[%c0_8, %c0_9] : memref<4x128xf32, #tpu.memory_space<vmem>>, vector<1x64xf32>
    %10 = vector.broadcast %9 : vector<1x64xf32> to vector<8x64xf32>
    %11 = arith.addf %8, %10 : vector<8x64xf32>
    %cst_10 = arith.constant 0.000000e+00 : f32
    %12 = vector.broadcast %cst_10 : f32 to vector<8x64xf32>
    %13 = arith.maximumf %11, %12 : vector<8x64xf32>
    %14 = arith.truncf %13 : vector<8x64xf32> to vector<8x64xbf16>
    %c0_11 = arith.constant 0 : index
    %c0_12 = arith.constant 0 : index
    %15 = vector.load %arg5[%c0_11, %c0_12] : memref<64x128xbf16, #tpu.memory_space<vmem>>, vector<64x128xbf16>
    %cst_13 = arith.constant dense<0.000000e+00> : vector<8x128xf32>
    %16 = tpu.matmul %14, %15, %cst_13 {dimension_numbers = #tpu.dot_dimension_numbers<[1], [0], [0], [1], [0, 0, 1, 1], [], []>} : vector<8x64xbf16>, vector<64x128xbf16>, vector<8x128xf32> -> vector<8x128xf32>
    %c1 = arith.constant 1 : index
    %c0_14 = arith.constant 0 : index
    %17 = vector.load %arg8[%c1, %c0_14] : memref<4x128xf32, #tpu.memory_space<vmem>>, vector<1x128xf32>
    %18 = vector.broadcast %17 : vector<1x128xf32> to vector<8x128xf32>
    %19 = arith.addf %16, %18 : vector<8x128xf32>
    %cst_15 = arith.constant 0.000000e+00 : f32
    %20 = vector.broadcast %cst_15 : f32 to vector<8x128xf32>
    %21 = arith.maximumf %19, %20 : vector<8x128xf32>
    %22 = arith.truncf %21 : vector<8x128xf32> to vector<8x128xbf16>
    %c0_16 = arith.constant 0 : index
    %c0_17 = arith.constant 0 : index
    %23 = vector.load %arg6[%c0_16, %c0_17] : memref<128x64xbf16, #tpu.memory_space<vmem>>, vector<128x64xbf16>
    %cst_18 = arith.constant dense<0.000000e+00> : vector<8x64xf32>
    %24 = tpu.matmul %22, %23, %cst_18 {dimension_numbers = #tpu.dot_dimension_numbers<[1], [0], [0], [1], [0, 0, 1, 1], [], []>} : vector<8x128xbf16>, vector<128x64xbf16>, vector<8x64xf32> -> vector<8x64xf32>
    %c2 = arith.constant 2 : index
    %c0_19 = arith.constant 0 : index
    %25 = vector.load %arg8[%c2, %c0_19] : memref<4x128xf32, #tpu.memory_space<vmem>>, vector<1x64xf32>
    %26 = vector.broadcast %25 : vector<1x64xf32> to vector<8x64xf32>
    %27 = arith.addf %24, %26 : vector<8x64xf32>
    %cst_20 = arith.constant 0.000000e+00 : f32
    %28 = vector.broadcast %cst_20 : f32 to vector<8x64xf32>
    %29 = arith.maximumf %27, %28 : vector<8x64xf32>
    %30 = arith.truncf %29 : vector<8x64xf32> to vector<8x64xbf16>
    %c0_21 = arith.constant 0 : index
    %c0_22 = arith.constant 0 : index
    %31 = vector.load %arg7[%c0_21, %c0_22] : memref<64x3xbf16, #tpu.memory_space<vmem>>, vector<64x3xbf16>
    %cst_23 = arith.constant dense<0.000000e+00> : vector<8x3xf32>
    %32 = tpu.matmul %30, %31, %cst_23 {dimension_numbers = #tpu.dot_dimension_numbers<[1], [0], [0], [1], [0, 0, 1, 1], [], []>} : vector<8x64xbf16>, vector<64x3xbf16>, vector<8x3xf32> -> vector<8x3xf32>
    %c3 = arith.constant 3 : index
    %c0_24 = arith.constant 0 : index
    %33 = vector.load %arg8[%c3, %c0_24] : memref<4x128xf32, #tpu.memory_space<vmem>>, vector<1x3xf32>
    %34 = vector.broadcast %33 : vector<1x3xf32> to vector<8x3xf32>
    %35 = arith.addf %32, %34 : vector<8x3xf32>
    %36 = arith.negf %35 : vector<8x3xf32>
    %37 = math.exp %36 : vector<8x3xf32>
    %cst_25 = arith.constant 1.000000e+00 : f32
    %38 = vector.broadcast %cst_25 : f32 to vector<8x3xf32>
    %39 = arith.addf %38, %37 : vector<8x3xf32>
    %40 = arith.divf %38, %39 : vector<8x3xf32>
    %41 = tpu.iota {dimensions = array<i32: 1>} : vector<8x3xi32>
    %c0_i32 = arith.constant 0 : i32
    %42 = vector.broadcast %c0_i32 : i32 to vector<8x3xi32>
    %43 = arith.cmpi eq, %41, %42 : vector<8x3xi32>
    %c1_i32 = arith.constant 1 : i32
    %44 = vector.broadcast %c1_i32 : i32 to vector<8x3xi32>
    %45 = arith.cmpi eq, %41, %44 : vector<8x3xi32>
    %cst_26 = arith.constant 6.900000e+02 : f32
    %cst_27 = arith.constant 1.300000e+01 : f32
    %46 = vector.broadcast %cst_26 : f32 to vector<8x3xf32>
    %47 = vector.broadcast %cst_27 : f32 to vector<8x3xf32>
    %48 = arith.select %45, %46, %47 : vector<8x3xi1>, vector<8x3xf32>
    %cst_28 = arith.constant 1.100000e+00 : f32
    %49 = vector.broadcast %cst_28 : f32 to vector<8x3xf32>
    %50 = arith.select %43, %49, %48 : vector<8x3xi1>, vector<8x3xf32>
    %c0_i32_29 = arith.constant 0 : i32
    %51 = vector.broadcast %c0_i32_29 : i32 to vector<8x3xi32>
    %52 = arith.cmpi eq, %41, %51 : vector<8x3xi32>
    %c1_i32_30 = arith.constant 1 : i32
    %53 = vector.broadcast %c1_i32_30 : i32 to vector<8x3xi32>
    %54 = arith.cmpi eq, %41, %53 : vector<8x3xi32>
    %cst_31 = arith.constant 1.000000e+01 : f32
    %cst_32 = arith.constant 1.500000e+01 : f32
    %55 = vector.broadcast %cst_31 : f32 to vector<8x3xf32>
    %56 = vector.broadcast %cst_32 : f32 to vector<8x3xf32>
    %57 = arith.select %54, %55, %56 : vector<8x3xi1>, vector<8x3xf32>
    %cst_33 = arith.constant 2.000000e-01 : f32
    %58 = vector.broadcast %cst_33 : f32 to vector<8x3xf32>
    %59 = arith.select %52, %58, %57 : vector<8x3xi1>, vector<8x3xf32>
    %60 = arith.mulf %40, %50 : vector<8x3xf32>
    %61 = arith.addf %60, %59 : vector<8x3xf32>
    %c0_34 = arith.constant 0 : index
    %c0_35 = arith.constant 0 : index
    %62 = vector.load %arg9[%c0_34, %c0_35] : memref<8x3xf32, #tpu.memory_space<vmem>>, vector<8x3xf32>
    tpu.vector_store %arg9[%c0_34, %c0_35], %61 {strides = array<i32>} : memref<8x3xf32, #tpu.memory_space<vmem>>, vector<8x3xf32>,
    return
  }
  func.func @transform_0(%arg0: i32) -> (i32, i32) {
    %c0_i32 = arith.constant 0 : i32
    %c0_i32_0 = arith.constant 0 : i32
    return %arg0, %c0_i32 : i32, i32
  }
  func.func @transform_1(%arg0: i32) -> (i32, i32) {
    %c0_i32 = arith.constant 0 : i32
    %c0_i32_0 = arith.constant 0 : i32
    return %arg0, %c0_i32 : i32, i32
  }
  func.func @transform_2(%arg0: i32) -> (i32, i32) {
    %c0_i32 = arith.constant 0 : i32
    %c0_i32_0 = arith.constant 0 : i32
    %c0_i32_1 = arith.constant 0 : i32
    return %c0_i32, %c0_i32_0 : i32, i32
  }
  func.func @transform_3(%arg0: i32) -> (i32, i32) {
    %c0_i32 = arith.constant 0 : i32
    %c0_i32_0 = arith.constant 0 : i32
    %c0_i32_1 = arith.constant 0 : i32
    return %c0_i32, %c0_i32_0 : i32, i32
  }
  func.func @transform_4(%arg0: i32) -> (i32, i32) {
    %c0_i32 = arith.constant 0 : i32
    %c0_i32_0 = arith.constant 0 : i32
    %c0_i32_1 = arith.constant 0 : i32
    return %c0_i32, %c0_i32_0 : i32, i32
  }
  func.func @transform_5(%arg0: i32) -> (i32, i32) {
    %c0_i32 = arith.constant 0 : i32
    %c0_i32_0 = arith.constant 0 : i32
    %c0_i32_1 = arith.constant 0 : i32
    return %c0_i32, %c0_i32_0 : i32, i32
  }
  func.func @transform_6(%arg0: i32) -> (i32, i32) {
    %c0_i32 = arith.constant 0 : i32
    %c0_i32_0 = arith.constant 0 : i32
    %c0_i32_1 = arith.constant 0 : i32
    return %c0_i32, %c0_i32_0 : i32, i32
  }
  func.func @transform_7(%arg0: i32) -> (i32, i32) {
    %c0_i32 = arith.constant 0 : i32
    %c0_i32_0 = arith.constant 0 : i32
    %c0_i32_1 = arith.constant 0 : i32
    return %c0_i32, %c0_i32_0 : i32, i32
  }
  func.func @transform_8(%arg0: i32) -> (i32, i32) {
    %c0_i32 = arith.constant 0 : i32
    %c0_i32_0 = arith.constant 0 : i32
    return %arg0, %c0_i32 : i32, i32
  }
}

</mosaic_0001>

<llo_original>
// kernel: generator_forward.1
$region0: #{generator_forward.1}
  #allocation0 [shape = 'u32[]', space=smem, size = 0x4, offset = 0x4, fixed_abs, tag = 'smem constant byte address 0x4 - core index']
  #allocation1 [shape = 'u32[144,128]{1,0:T(1,128)}', space=vmem, size = 0x12000, scoped, tag = 'internal scratch']
  %s0 = inlined_call_operand.vmem [shape: f32[8,32], index: 0, kind: input, shape index: {}]
  %s1 = inlined_call_operand.vmem [shape: f32[8,822], index: 1, kind: input, shape index: {}]
  %s2 = inlined_call_operand.vmem [shape: bf16[32,64], index: 2, kind: input, shape index: {}]
  %s3 = inlined_call_operand.vmem [shape: bf16[822,64], index: 3, kind: input, shape index: {}]
  %s4 = inlined_call_operand.vmem [shape: bf16[64,128], index: 4, kind: input, shape index: {}]
  %s5 = inlined_call_operand.vmem [shape: bf16[128,64], index: 5, kind: input, shape index: {}]
  %s6 = inlined_call_operand.vmem [shape: bf16[64,3], index: 6, kind: input, shape index: {}]
  %s7 = inlined_call_operand.vmem [shape: f32[4,128], index: 7, kind: input, shape index: {}]
  %s8 = inlined_call_operand.vmem [shape: f32[8,3], index: 8, kind: output, shape index: {}]
  %s9 = sld [smem:[#allocation0]]
  $region42: #{generator_forward.1} parent=0
    _
  %s11 = ssub.s32 1, %s9
  %s12 = scalar_select 0, %s11, %s9
  // Predicated region
  $region2: #{generator_forward.1} parent=0 // pred_check
    _
  $region3: #{generator_forward.1} parent=0 // pred_check_branch
    %14 = sbr.rel (0) target = $region5
  $region4: #{generator_forward.1} parent=0 // pred_region
    _
  $region5: #{generator_forward.1} parent=0 // pred_fallthru
    _
  // Predicated region
  $region6: #{generator_forward.1} parent=0 // pred_check
    _
  $region7: #{generator_forward.1} parent=0 // pred_check_branch
    %16 = sbr.rel (0) target = $region9
  $region8: #{generator_forward.1} parent=0 // pred_region
    _
  $region9: #{generator_forward.1} parent=0 // pred_fallthru
    _
  // Predicated region
  $region10: #{generator_forward.1} parent=0 // pred_check
    _
  $region11: #{generator_forward.1} parent=0 // pred_check_branch
    %18 = sbr.rel (0) target = $region13
  $region12: #{generator_forward.1} parent=0 // pred_region
    _
  $region13: #{generator_forward.1} parent=0 // pred_fallthru
    _
  // Predicated region
  $region14: #{generator_forward.1} parent=0 // pred_check
    _
  $region15: #{generator_forward.1} parent=0 // pred_check_branch
    %20 = sbr.rel (0) target = $region17
  $region16: #{generator_forward.1} parent=0 // pred_region
    _
  $region17: #{generator_forward.1} parent=0 // pred_fallthru
    _
  // Predicated region
  $region18: #{generator_forward.1} parent=0 // pred_check
    _
  $region19: #{generator_forward.1} parent=0 // pred_check_branch
    %22 = sbr.rel (0) target = $region21
  $region20: #{generator_forward.1} parent=0 // pred_region
    _
  $region21: #{generator_forward.1} parent=0 // pred_fallthru
    _
  // Predicated region
  $region22: #{generator_forward.1} parent=0 // pred_check
    _
  $region23: #{generator_forward.1} parent=0 // pred_check_branch
    %24 = sbr.rel (0) target = $region25
  $region24: #{generator_forward.1} parent=0 // pred_region
    _
  $region25: #{generator_forward.1} parent=0 // pred_fallthru
    _
  // Predicated region
  $region26: #{generator_forward.1} parent=0 // pred_check
    _
  $region27: #{generator_forward.1} parent=0 // pred_check_branch
    %26 = sbr.rel (0) target = $region29
  $region28: #{generator_forward.1} parent=0 // pred_region
    _
  $region29: #{generator_forward.1} parent=0 // pred_fallthru
    _
  // Predicated region
  $region30: #{generator_forward.1} parent=0 // pred_check
    _
  $region31: #{generator_forward.1} parent=0 // pred_check_branch
    %28 = sbr.rel (0) target = $region33
  $region32: #{generator_forward.1} parent=0 // pred_region
    _
  $region33: #{generator_forward.1} parent=0 // pred_fallthru
    _
  %v30 = vld [vmem:[%s0] sm:$0xff]
  %v31 = vpack.c.bf16 %v30, %v30
  %v32 = vld [vmem:[%s1] sm:$0xff]
  %v33 = vld [vmem:[%s1 + $0x8] sm:$0xff]
  %v34 = vld [vmem:[%s1 + $0x10] sm:$0xff]
  %v35 = vld [vmem:[%s1 + $0x18] sm:$0xff]
  %v36 = vld [vmem:[%s1 + $0x20] sm:$0xff]
  %v37 = vld [vmem:[%s1 + $0x28] sm:$0xff]
  %v38 = vld [vmem:[%s1 + $0x30] sm:$0xff]
  %v39 = vpack.c.bf16 %v32, %v32
  %v40 = vpack.c.bf16 %v33, %v33
  %v41 = vpack.c.bf16 %v34, %v34
  %v42 = vpack.c.bf16 %v35, %v35
  %v43 = vpack.c.bf16 %v36, %v36
  %v44 = vpack.c.bf16 %v37, %v37
  %v45 = vpack.c.bf16 %v38, %v38
  %v46 = vld [vmem:[%s2] sm:$0xf]
  %v47 = vld [vmem:[%s2 + $0x4] sm:$0xf]
  %v48 = vld [vmem:[%s2 + $0x8] sm:$0xf]
  %v49 = vld [vmem:[%s2 + $0xc] sm:$0xf]
  %v50 = vld [vmem:[%s3] sm:$0xf]
  %v51 = vld [vmem:[%s3 + $0x4] sm:$0xf]
  %v52 = vld [vmem:[%s3 + $0x8] sm:$0xf]
  %v53 = vld [vmem:[%s3 + $0xc] sm:$0xf]
  %v54 = vld [vmem:[%s3 + $0x10] sm:$0xf]
  %v55 = vld [vmem:[%s3 + $0x14] sm:$0xf]
  %v56 = vld [vmem:[%s3 + $0x18] sm:$0xf]
  %v57 = vld [vmem:[%s3 + $0x1c] sm:$0xf]
  %v58 = vld [vmem:[%s3 + $0x20] sm:$0xf]
  %v59 = vld [vmem:[%s3 + $0x24] sm:$0xf]
  %v60 = vld [vmem:[%s3 + $0x28] sm:$0xf]
  %v61 = vld [vmem:[%s3 + $0x2c] sm:$0xf]
  %v62 = vld [vmem:[%s3 + $0x30] sm:$0xf]
  %v63 = vld [vmem:[%s3 + $0x34] sm:$0xf]
  %v64 = vld [vmem:[%s3 + $0x38] sm:$0xf]
  %v65 = vld [vmem:[%s3 + $0x3c] sm:$0xf]
  %v66 = vld [vmem:[%s3 + $0x40] sm:$0xf]
  %v67 = vld [vmem:[%s3 + $0x44] sm:$0xf]
  %v68 = vld [vmem:[%s3 + $0x48] sm:$0xf]
  %v69 = vld [vmem:[%s3 + $0x4c] sm:$0xf]
  %v70 = vld [vmem:[%s3 + $0x50] sm:$0xf]
  %v71 = vld [vmem:[%s3 + $0x54] sm:$0xf]
  %v72 = vld [vmem:[%s3 + $0x58] sm:$0xf]
  %v73 = vld [vmem:[%s3 + $0x5c] sm:$0xf]
  %v74 = vld [vmem:[%s3 + $0x60] sm:$0xf]
  %v75 = vld [vmem:[%s3 + $0x64] sm:$0xf]
  %v76 = vld [vmem:[%s3 + $0x68] sm:$0xf]
  %v77 = vld [vmem:[%s3 + $0x6c] sm:$0xf]
  %v78 = vld [vmem:[%s3 + $0x70] sm:$0xf]
  %v79 = vld [vmem:[%s3 + $0x74] sm:$0xf]
  %v80 = vld [vmem:[%s3 + $0x78] sm:$0xf]
  %v81 = vld [vmem:[%s3 + $0x7c] sm:$0xf]
  %v82 = vld [vmem:[%s3 + $0x80] sm:$0xf]
  %v83 = vld [vmem:[%s3 + $0x84] sm:$0xf]
  %v84 = vld [vmem:[%s3 + $0x88] sm:$0xf]
  %v85 = vld [vmem:[%s3 + $0x8c] sm:$0xf]
  %v86 = vld [vmem:[%s3 + $0x90] sm:$0xf]
  %v87 = vld [vmem:[%s3 + $0x94] sm:$0xf]
  %v88 = vld [vmem:[%s3 + $0x98] sm:$0xf]
  %v89 = vld [vmem:[%s3 + $0x9c] sm:$0xf]
  %v90 = vld [vmem:[%s3 + $0xa0] sm:$0xf]
  %v91 = vld [vmem:[%s3 + $0xa4] sm:$0xf]
  %v92 = vld [vmem:[%s3 + $0xa8] sm:$0xf]
  %v93 = vld [vmem:[%s3 + $0xac] sm:$0xf]
  %v94 = vld [vmem:[%s3 + $0xb0] sm:$0xf]
  %v95 = vld [vmem:[%s3 + $0xb4] sm:$0xf]
  %v96 = vld [vmem:[%s3 + $0xb8] sm:$0xf]
  %v97 = vld [vmem:[%s3 + $0xbc] sm:$0xf]
  %v98 = vld [vmem:[%s3 + $0xc0] sm:$0xf]
  %v99 = vld [vmem:[%s3 + $0xc4] sm:$0xf]
  %v100 = vld [vmem:[%s3 + $0xc8] sm:$0xf]
  %v101 = vld [vmem:[%s3 + $0xcc] sm:$0xf]
  %v102 = vld [vmem:[%s3 + $0xd0] sm:$0xf]
  %v103 = vld [vmem:[%s3 + $0xd4] sm:$0xf]
  %v104 = vld [vmem:[%s3 + $0xd8] sm:$0xf]
  %v105 = vld [vmem:[%s3 + $0xdc] sm:$0xf]
  %v106 = vld [vmem:[%s3 + $0xe0] sm:$0xf]
  %v107 = vld [vmem:[%s3 + $0xe4] sm:$0xf]
  %v108 = vld [vmem:[%s3 + $0xe8] sm:$0xf]
  %v109 = vld [vmem:[%s3 + $0xec] sm:$0xf]
  %v110 = vld [vmem:[%s3 + $0xf0] sm:$0xf]
  %v111 = vld [vmem:[%s3 + $0xf4] sm:$0xf]
  %v112 = vld [vmem:[%s3 + $0xf8] sm:$0xf]
  %v113 = vld [vmem:[%s3 + $0xfc] sm:$0xf]
  %v114 = vld [vmem:[%s3 + $0x100] sm:$0xf]
  %v115 = vld [vmem:[%s3 + $0x104] sm:$0xf]
  %v116 = vld [vmem:[%s3 + $0x108] sm:$0xf]
  %v117 = vld [vmem:[%s3 + $0x10c] sm:$0xf]
  %v118 = vld [vmem:[%s3 + $0x110] sm:$0xf]
  %v119 = vld [vmem:[%s3 + $0x114] sm:$0xf]
  %v120 = vld [vmem:[%s3 + $0x118] sm:$0xf]
  %v121 = vld [vmem:[%s3 + $0x11c] sm:$0xf]
  %v122 = vld [vmem:[%s3 + $0x120] sm:$0xf]
  %v123 = vld [vmem:[%s3 + $0x124] sm:$0xf]
  %v124 = vld [vmem:[%s3 + $0x128] sm:$0xf]
  %v125 = vld [vmem:[%s3 + $0x12c] sm:$0xf]
  %v126 = vld [vmem:[%s3 + $0x130] sm:$0xf]
  %v127 = vld [vmem:[%s3 + $0x134] sm:$0xf]
  %v128 = vld [vmem:[%s3 + $0x138] sm:$0xf]
  %v129 = vld [vmem:[%s3 + $0x13c] sm:$0xf]
  %v130 = vld [vmem:[%s3 + $0x140] sm:$0xf]
  %v131 = vld [vmem:[%s3 + $0x144] sm:$0xf]
  %v132 = vld [vmem:[%s3 + $0x148] sm:$0xf]
  %v133 = vld [vmem:[%s3 + $0x14c] sm:$0xf]
  %v134 = vld [vmem:[%s3 + $0x150] sm:$0xf]
  %v135 = vld [vmem:[%s3 + $0x154] sm:$0xf]
  %v136 = vld [vmem:[%s3 + $0x158] sm:$0xf]
  %v137 = vld [vmem:[%s3 + $0x15c] sm:$0xf]
  %v138 = vld [vmem:[%s3 + $0x160] sm:$0xf]
  %v139 = vld [vmem:[%s3 + $0x164] sm:$0xf]
  %v140 = vld [vmem:[%s3 + $0x168] sm:$0xf]
  %v141 = vld [vmem:[%s3 + $0x16c] sm:$0xf]
  %v142 = vld [vmem:[%s3 + $0x170] sm:$0xf]
  %v143 = vld [vmem:[%s3 + $0x174] sm:$0xf]
  %v144 = vld [vmem:[%s3 + $0x178] sm:$0xf]
  %v145 = vld [vmem:[%s3 + $0x17c] sm:$0xf]
  %v146 = vld [vmem:[%s3 + $0x180] sm:$0xf]
  %v147 = vld [vmem:[%s3 + $0x184] sm:$0xf]
  %v148 = vld [vmem:[%s3 + $0x188] sm:$0xf]
  %v149 = vld [vmem:[%s3 + $0x18c] sm:$0xf]
  %v150 = vld [vmem:[%s3 + $0x190] sm:$0xf]
  %v151 = vld [vmem:[%s3 + $0x194] sm:$0xf]
  %v152 = vld [vmem:[%s3 + $0x198] sm:$0x7]
  %v256 = vunpack.c.l.b16 %v50
  %v257 = vunpack.c.l.b16 %v51
  %v258 = vunpack.c.l.b16 %v52
  %v259 = vunpack.c.l.b16 %v53
  %v260 = vunpack.c.l.b16 %v54
  %v261 = vunpack.c.l.b16 %v55
  %v262 = vunpack.c.l.b16 %v56
  %v263 = vunpack.c.l.b16 %v57
  %v264 = vunpack.c.l.b16 %v58
  %v265 = vunpack.c.l.b16 %v59
  %v266 = vunpack.c.l.b16 %v60
  %v267 = vunpack.c.l.b16 %v61
  %v268 = vunpack.c.l.b16 %v62
  %v269 = vunpack.c.l.b16 %v63
  %v270 = vunpack.c.l.b16 %v64
  %v271 = vunpack.c.l.b16 %v65
  %v272 = vunpack.c.l.b16 %v66
  %v273 = vunpack.c.l.b16 %v67
  %v274 = vunpack.c.l.b16 %v68
  %v275 = vunpack.c.l.b16 %v69
  %v276 = vunpack.c.l.b16 %v70
  %v277 = vunpack.c.l.b16 %v71
  %v278 = vunpack.c.l.b16 %v72
  %v279 = vunpack.c.l.b16 %v73
  %v280 = vunpack.c.l.b16 %v74
  %v281 = vunpack.c.l.b16 %v75
  %v282 = vunpack.c.l.b16 %v76
  %v283 = vunpack.c.l.b16 %v77
  %v284 = vunpack.c.l.b16 %v78
  %v285 = vunpack.c.l.b16 %v79
  %v286 = vunpack.c.l.b16 %v80
  %v287 = vunpack.c.l.b16 %v81
  %v288 = vunpack.c.l.b16 %v82
  %v289 = vunpack.c.l.b16 %v83
  %v290 = vunpack.c.l.b16 %v84
  %v291 = vunpack.c.l.b16 %v85
  %v292 = vunpack.c.l.b16 %v86
  %v293 = vunpack.c.l.b16 %v87
  %v294 = vunpack.c.l.b16 %v88
  %v295 = vunpack.c.l.b16 %v89
  %v296 = vunpack.c.l.b16 %v90
  %v297 = vunpack.c.l.b16 %v91
  %v298 = vunpack.c.l.b16 %v92
  %v299 = vunpack.c.l.b16 %v93
  %v300 = vunpack.c.l.b16 %v94
  %v301 = vunpack.c.l.b16 %v95
  %v302 = vunpack.c.l.b16 %v96
  %v303 = vunpack.c.l.b16 %v97
  %v304 = vunpack.c.l.b16 %v98
  %v305 = vunpack.c.l.b16 %v99
  %v306 = vunpack.c.l.b16 %v100
  %v307 = vunpack.c.l.b16 %v101
  %v308 = vunpack.c.l.b16 %v102
  %v309 = vunpack.c.l.b16 %v103
  %v310 = vunpack.c.l.b16 %v104
  %v311 = vunpack.c.l.b16 %v105
  %v312 = vunpack.c.l.b16 %v106
  %v313 = vunpack.c.l.b16 %v107
  %v314 = vunpack.c.l.b16 %v108
  %v315 = vunpack.c.l.b16 %v109
  %v316 = vunpack.c.l.b16 %v110
  %v317 = vunpack.c.l.b16 %v111
  %v318 = vunpack.c.l.b16 %v112
  %v319 = vunpack.c.l.b16 %v113
  %v320 = vunpack.c.l.b16 %v114
  %v321 = vunpack.c.l.b16 %v115
  %v322 = vunpack.c.l.b16 %v116
  %v323 = vunpack.c.l.b16 %v117
  %v324 = vunpack.c.l.b16 %v118
  %v325 = vunpack.c.l.b16 %v119
  %v326 = vunpack.c.l.b16 %v120
  %v327 = vunpack.c.l.b16 %v121
  %v328 = vunpack.c.l.b16 %v122
  %v329 = vunpack.c.l.b16 %v123
  %v330 = vunpack.c.l.b16 %v124
  %v331 = vunpack.c.l.b16 %v125
  %v332 = vunpack.c.l.b16 %v126
  %v333 = vunpack.c.l.b16 %v127
  %v334 = vunpack.c.l.b16 %v128
  %v335 = vunpack.c.l.b16 %v129
  %v336 = vunpack.c.l.b16 %v130
  %v337 = vunpack.c.l.b16 %v131
  %v338 = vunpack.c.l.b16 %v132
  %v339 = vunpack.c.l.b16 %v133
  %v340 = vunpack.c.l.b16 %v134
  %v341 = vunpack.c.l.b16 %v135
  %v342 = vunpack.c.l.b16 %v136
  %v343 = vunpack.c.l.b16 %v137
  %v344 = vunpack.c.l.b16 %v138
  %v345 = vunpack.c.l.b16 %v139
  %v346 = vunpack.c.l.b16 %v140
  %v347 = vunpack.c.l.b16 %v141
  %v348 = vunpack.c.l.b16 %v142
  %v349 = vunpack.c.l.b16 %v143
  %v350 = vunpack.c.l.b16 %v144
  %v351 = vunpack.c.l.b16 %v145
  %v352 = vunpack.c.l.b16 %v146
  %v353 = vunpack.c.l.b16 %v147
  %v354 = vunpack.c.l.b16 %v148
  %v355 = vunpack.c.l.b16 %v149
  %v356 = vunpack.c.l.b16 %v150
  %v357 = vunpack.c.l.b16 %v151
  %v358 = vunpack.c.l.b16 %v152
  %v359 = vpack.c.b16 %v257, %v256
  %v360 = vpack.c.b16 %v259, %v258
  %v361 = vpack.c.b16 %v261, %v260
  %v362 = vpack.c.b16 %v263, %v262
  %v363 = vpack.c.b16 %v265, %v264
  %v364 = vpack.c.b16 %v267, %v266
  %v365 = vpack.c.b16 %v269, %v268
  %v366 = vpack.c.b16 %v271, %v270
  %v367 = vpack.c.b16 %v273, %v272
  %v368 = vpack.c.b16 %v275, %v274
  %v369 = vpack.c.b16 %v277, %v276
  %v370 = vpack.c.b16 %v279, %v278
  %v371 = vpack.c.b16 %v281, %v280
  %v372 = vpack.c.b16 %v283, %v282
  %v373 = vpack.c.b16 %v285, %v284
  %v374 = vpack.c.b16 %v287, %v286
  %v375 = vpack.c.b16 %v289, %v288
  %v376 = vpack.c.b16 %v291, %v290
  %v377 = vpack.c.b16 %v293, %v292
  %v378 = vpack.c.b16 %v295, %v294
  %v379 = vpack.c.b16 %v297, %v296
  %v380 = vpack.c.b16 %v299, %v298
  %v381 = vpack.c.b16 %v301, %v300
  %v382 = vpack.c.b16 %v303, %v302
  %v383 = vpack.c.b16 %v305, %v304
  %v384 = vpack.c.b16 %v307, %v306
  %v385 = vpack.c.b16 %v309, %v308
  %v386 = vpack.c.b16 %v311, %v310
  %v387 = vpack.c.b16 %v313, %v312
  %v388 = vpack.c.b16 %v315, %v314
  %v389 = vpack.c.b16 %v317, %v316
  %v390 = vpack.c.b16 %v319, %v318
  %v391 = vpack.c.b16 %v321, %v320
  %v392 = vpack.c.b16 %v323, %v322
  %v393 = vpack.c.b16 %v325, %v324
  %v394 = vpack.c.b16 %v327, %v326
  %v395 = vpack.c.b16 %v329, %v328
  %v396 = vpack.c.b16 %v331, %v330
  %v397 = vpack.c.b16 %v333, %v332
  %v398 = vpack.c.b16 %v335, %v334
  %v399 = vpack.c.b16 %v337, %v336
  %v400 = vpack.c.b16 %v339, %v338
  %v401 = vpack.c.b16 %v341, %v340
  %v402 = vpack.c.b16 %v343, %v342
  %v403 = vpack.c.b16 %v345, %v344
  %v404 = vpack.c.b16 %v347, %v346
  %v405 = vpack.c.b16 %v349, %v348
  %v406 = vpack.c.b16 %v351, %v350
  %v407 = vpack.c.b16 %v353, %v352
  %v408 = vpack.c.b16 %v355, %v354
  %v409 = vpack.c.b16 %v357, %v356
  %v410 = vpack.c.b16 %v358, %v358
  %vm462 = vcmask 441344
  %v464 = vsel %vm462, %v45, 0
  %vm466 = vcmask 1042432
  %v468 = vsel %vm466, %v410, 0
  %470 = vmatprep.subr.bf16.mxu0 0
  %471 = vmatpush1.bf16.msra.mxu0 %v366
  %472 = vmatprep.subr.bf16.mxu0 0
  %473 = vmatpush1.bf16.msra.mxu0 %v365
  %474 = vmatprep.subr.bf16.mxu0 0
  %475 = vmatpush1.bf16.msra.mxu0 %v364
  %476 = vmatprep.subr.bf16.mxu0 0
  %477 = vmatpush1.bf16.msra.mxu0 %v363
  %478 = vmatprep.subr.bf16.mxu0 0
  %479 = vmatpush1.bf16.msra.mxu0 %v362
  %480 = vmatprep.subr.bf16.mxu0 0
  %481 = vmatpush1.bf16.msra.mxu0 %v361
  %482 = vmatprep.subr.bf16.mxu0 0
  %483 = vmatpush1.bf16.msra.mxu0 %v360
  %484 = vmatprep.subr.bf16.mxu0 0
  %485 = vmatpush1.bf16.msra.mxu0 %v359
  %486 = vmatprep.subr.bf16.mxu0 0
  %487 = vmatpush2.bf16.msra.mxu0 %v374
  %488 = vmatprep.subr.bf16.mxu0 0
  %489 = vmatpush2.bf16.msra.mxu0 %v373
  %490 = vmatprep.subr.bf16.mxu0 0
  %491 = vmatpush2.bf16.msra.mxu0 %v372
  %492 = vmatprep.subr.bf16.mxu0 0
  %493 = vmatpush2.bf16.msra.mxu0 %v371
  %494 = vmatprep.subr.bf16.mxu0 0
  %495 = vmatpush2.bf16.msra.mxu0 %v370
  %496 = vmatprep.subr.bf16.mxu0 0
  %497 = vmatpush2.bf16.msra.mxu0 %v369
  %498 = vmatprep.subr.bf16.mxu0 0
  %499 = vmatpush2.bf16.msra.mxu0 %v368
  %500 = vmatprep.subr.bf16.mxu0 0
  %501 = vmatpush2.bf16.msra.mxu0 %v367
  %502 = vmatprep.mubr.bf16.mxu0 %v40
  %503 = vmatmul.mubr.bf16.gmra.mxu0 %v39
  %v504 = vpop.f32.mrf.mxu0
  %v505 = vadd.f32 0.0, %v504
  %v506 = vpop.f32.mrf.mxu0
  %v507 = vpop.f32.mrf.mxu0
  %v508 = vpop.f32.mrf.mxu0
  %509 = vdwg.mxu0
  %510 = vmatprep.subr.bf16.mxu0 0
  %511 = vmatpush1.bf16.msra.mxu0 %v382
  %512 = vmatprep.subr.bf16.mxu0 0
  %513 = vmatpush1.bf16.msra.mxu0 %v381
  %514 = vmatprep.subr.bf16.mxu0 0
  %515 = vmatpush1.bf16.msra.mxu0 %v380
  %516 = vmatprep.subr.bf16.mxu0 0
  %517 = vmatpush1.bf16.msra.mxu0 %v379
  %518 = vmatprep.subr.bf16.mxu0 0
  %519 = vmatpush1.bf16.msra.mxu0 %v378
  %520 = vmatprep.subr.bf16.mxu0 0
  %521 = vmatpush1.bf16.msra.mxu0 %v377
  %522 = vmatprep.subr.bf16.mxu0 0
  %523 = vmatpush1.bf16.msra.mxu0 %v376
  %524 = vmatprep.subr.bf16.mxu0 0
  %525 = vmatpush1.bf16.msra.mxu0 %v375
  %526 = vmatprep.subr.bf16.mxu0 0
  %527 = vmatpush2.bf16.msra.mxu0 %v390
  %528 = vmatprep.subr.bf16.mxu0 0
  %529 = vmatpush2.bf16.msra.mxu0 %v389
  %530 = vmatprep.subr.bf16.mxu0 0
  %531 = vmatpush2.bf16.msra.mxu0 %v388
  %532 = vmatprep.subr.bf16.mxu0 0
  %533 = vmatpush2.bf16.msra.mxu0 %v387
  %534 = vmatprep.subr.bf16.mxu0 0
  %535 = vmatpush2.bf16.msra.mxu0 %v386
  %536 = vmatprep.subr.bf16.mxu0 0
  %537 = vmatpush2.bf16.msra.mxu0 %v385
  %538 = vmatprep.subr.bf16.mxu0 0
  %539 = vmatpush2.bf16.msra.mxu0 %v384
  %540 = vmatprep.subr.bf16.mxu0 0
  %541 = vmatpush2.bf16.msra.mxu0 %v383
  %542 = vmatprep.mubr.bf16.mxu0 %v42
  %543 = vmatmul.mubr.bf16.gmra.mxu0 %v41
  %v544 = vpop.f32.mrf.mxu0
  %v545 = vadd.f32 %v505, %v544
  %v546 = vpop.f32.mrf.mxu0
  %v547 = vpop.f32.mrf.mxu0
  %v548 = vpop.f32.mrf.mxu0
  %549 = vdwg.mxu0
  %550 = vmatprep.subr.bf16.mxu0 0
  %551 = vmatpush1.bf16.msra.mxu0 %v398
  %552 = vmatprep.subr.bf16.mxu0 0
  %553 = vmatpush1.bf16.msra.mxu0 %v397
  %554 = vmatprep.subr.bf16.mxu0 0
  %555 = vmatpush1.bf16.msra.mxu0 %v396
  %556 = vmatprep.subr.bf16.mxu0 0
  %557 = vmatpush1.bf16.msra.mxu0 %v395
  %558 = vmatprep.subr.bf16.mxu0 0
  %559 = vmatpush1.bf16.msra.mxu0 %v394
  %560 = vmatprep.subr.bf16.mxu0 0
  %561 = vmatpush1.bf16.msra.mxu0 %v393
  %562 = vmatprep.subr.bf16.mxu0 0
  %563 = vmatpush1.bf16.msra.mxu0 %v392
  %564 = vmatprep.subr.bf16.mxu0 0
  %565 = vmatpush1.bf16.msra.mxu0 %v391
  %566 = vmatprep.subr.bf16.mxu0 0
  %567 = vmatpush2.bf16.msra.mxu0 %v406
  %568 = vmatprep.subr.bf16.mxu0 0
  %569 = vmatpush2.bf16.msra.mxu0 %v405
  %570 = vmatprep.subr.bf16.mxu0 0
  %571 = vmatpush2.bf16.msra.mxu0 %v404
  %572 = vmatprep.subr.bf16.mxu0 0
  %573 = vmatpush2.bf16.msra.mxu0 %v403
  %574 = vmatprep.subr.bf16.mxu0 0
  %575 = vmatpush2.bf16.msra.mxu0 %v402
  %576 = vmatprep.subr.bf16.mxu0 0
  %577 = vmatpush2.bf16.msra.mxu0 %v401
  %578 = vmatprep.subr.bf16.mxu0 0
  %579 = vmatpush2.bf16.msra.mxu0 %v400
  %580 = vmatprep.subr.bf16.mxu0 0
  %581 = vmatpush2.bf16.msra.mxu0 %v399
  %582 = vmatprep.mubr.bf16.mxu0 %v44
  %583 = vmatmul.mubr.bf16.gmra.mxu0 %v43
  %v584 = vpop.f32.mrf.mxu0
  %v585 = vadd.f32 %v545, %v584
  %v586 = vpop.f32.mrf.mxu0
  %v587 = vpop.f32.mrf.mxu0
  %v588 = vpop.f32.mrf.mxu0
  %589 = vdwg.mxu0
  %590 = vmatprep.subr.bf16.mxu0 0
  %591 = vmatpush1.bf16.msra.mxu0 0
  %592 = vmatprep.subr.bf16.mxu0 0
  %593 = vmatpush1.bf16.msra.mxu0 0
  %594 = vmatprep.subr.bf16.mxu0 0
  %595 = vmatpush1.bf16.msra.mxu0 0
  %596 = vmatprep.subr.bf16.mxu0 0
  %597 = vmatpush1.bf16.msra.mxu0 0
  %598 = vmatprep.subr.bf16.mxu0 0
  %599 = vmatpush1.bf16.msra.mxu0 %v468
  %600 = vmatprep.subr.bf16.mxu0 0
  %601 = vmatpush1.bf16.msra.mxu0 %v409
  %602 = vmatprep.subr.bf16.mxu0 0
  %603 = vmatpush1.bf16.msra.mxu0 %v408
  %604 = vmatprep.subr.bf16.mxu0 0
  %605 = vmatpush1.bf16.msra.mxu0 %v407
  %606 = vmatprep.subr.bf16.mxu0 0
  %607 = vmatpush2.bf16.msra.mxu0 0
  %608 = vmatprep.subr.bf16.mxu0 0
  %609 = vmatpush2.bf16.msra.mxu0 0
  %610 = vmatprep.subr.bf16.mxu0 0
  %611 = vmatpush2.bf16.msra.mxu0 0
  %612 = vmatprep.subr.bf16.mxu0 0
  %613 = vmatpush2.bf16.msra.mxu0 0
  %614 = vmatprep.subr.bf16.mxu0 0
  %615 = vmatpush2.bf16.msra.mxu0 0
  %616 = vmatprep.subr.bf16.mxu0 0
  %617 = vmatpush2.bf16.msra.mxu0 0
  %618 = vmatprep.subr.bf16.mxu0 0
  %619 = vmatpush2.bf16.msra.mxu0 0
  %620 = vmatprep.subr.bf16.mxu0 0
  %621 = vmatpush2.bf16.msra.mxu0 0
  %622 = vmatprep.mubr.bf16.mxu0 0
  %623 = vmatmul.mubr.bf16.gmra.mxu0 %v464
  %v624 = vpop.f32.mrf.mxu0
  %v625 = vadd.f32 %v585, %v624
  %v626 = vpop.f32.mrf.mxu0
  %v627 = vpop.f32.mrf.mxu0
  %v628 = vpop.f32.mrf.mxu0
  %629 = vdwg.mxu0
  %v634 = vunpack.c.l.b16 %v46
  %v635 = vunpack.c.l.b16 %v47
  %v636 = vunpack.c.l.b16 %v48
  %v637 = vunpack.c.l.b16 %v49
  %v638 = vpack.c.b16 %v635, %v634
  %v639 = vpack.c.b16 %v637, %v636
  %vm642 = vcmask 261120
  %v644 = vsel %vm642, %v31, 0
  %646 = vmatprep.subr.bf16.mxu0 0
  %647 = vmatpush1.bf16.msra.mxu0 0
  %648 = vmatprep.subr.bf16.mxu0 0
  %649 = vmatpush1.bf16.msra.mxu0 0
  %650 = vmatprep.subr.bf16.mxu0 0
  %651 = vmatpush1.bf16.msra.mxu0 0
  %652 = vmatprep.subr.bf16.mxu0 0
  %653 = vmatpush1.bf16.msra.mxu0 0
  %654 = vmatprep.subr.bf16.mxu0 0
  %655 = vmatpush1.bf16.msra.mxu0 0
  %656 = vmatprep.subr.bf16.mxu0 0
  %657 = vmatpush1.bf16.msra.mxu0 0
  %658 = vmatprep.subr.bf16.mxu0 0
  %659 = vmatpush1.bf16.msra.mxu0 %v639
  %660 = vmatprep.subr.bf16.mxu0 0
  %661 = vmatpush1.bf16.msra.mxu0 %v638
  %662 = vmatprep.subr.bf16.mxu0 0
  %663 = vmatpush2.bf16.msra.mxu0 0
  %664 = vmatprep.subr.bf16.mxu0 0
  %665 = vmatpush2.bf16.msra.mxu0 0
  %666 = vmatprep.subr.bf16.mxu0 0
  %667 = vmatpush2.bf16.msra.mxu0 0
  %668 = vmatprep.subr.bf16.mxu0 0
  %669 = vmatpush2.bf16.msra.mxu0 0
  %670 = vmatprep.subr.bf16.mxu0 0
  %671 = vmatpush2.bf16.msra.mxu0 0
  %672 = vmatprep.subr.bf16.mxu0 0
  %673 = vmatpush2.bf16.msra.mxu0 0
  %674 = vmatprep.subr.bf16.mxu0 0
  %675 = vmatpush2.bf16.msra.mxu0 0
  %676 = vmatprep.subr.bf16.mxu0 0
  %677 = vmatpush2.bf16.msra.mxu0 0
  %678 = vmatprep.mubr.bf16.mxu0 0
  %679 = vmatmul.mubr.bf16.gmra.mxu0 %v644
  %v680 = vpop.f32.mrf.mxu0
  %v681 = vadd.f32 %v625, %v680
  %v682 = vpop.f32.mrf.mxu0
  %v683 = vpop.f32.mrf.mxu0
  %v684 = vpop.f32.mrf.mxu0
  %685 = vdwg.mxu0
  %v686 = vld [vmem:[%s7] sm:$0x1]
  %v687 = vlaneseq
  %v688 = vshrl.u32 %v687, 7
  %v689 = vsub.s32 0, %v688
  %v690 = vrot.slane %v686, %v689
  %v691 = vadd.f32 %v681, %v690
  %v692 = vmax.f32 %v691, 0.0
  %v693 = vpack.c.bf16 %v692, %v692
  %v694 = vld [vmem:[%s4] sm:$0xf]
  %v695 = vld [vmem:[%s4 + $0x4] sm:$0xf]
  %v696 = vld [vmem:[%s4 + $0x8] sm:$0xf]
  %v697 = vld [vmem:[%s4 + $0xc] sm:$0xf]
  %v698 = vld [vmem:[%s4 + $0x10] sm:$0xf]
  %v699 = vld [vmem:[%s4 + $0x14] sm:$0xf]
  %v700 = vld [vmem:[%s4 + $0x18] sm:$0xf]
  %v701 = vld [vmem:[%s4 + $0x1c] sm:$0xf]
  %v702 = vld [vmem:[%s7 + $0x1] sm:$0x1]
  %v703 = vlaneseq
  %v704 = vshrl.u32 %v703, 7
  %v705 = vsub.s32 0, %v704
  %v706 = vrot.slane %v702, %v705
  %v715 = vunpack.c.l.b16 %v694
  %v716 = vunpack.c.l.b16 %v695
  %v717 = vunpack.c.l.b16 %v696
  %v718 = vunpack.c.l.b16 %v697
  %v719 = vunpack.c.l.b16 %v698
  %v720 = vunpack.c.l.b16 %v699
  %v721 = vunpack.c.l.b16 %v700
  %v722 = vunpack.c.l.b16 %v701
  %v723 = vpack.c.b16 %v716, %v715
  %v724 = vpack.c.b16 %v718, %v717
  %v725 = vpack.c.b16 %v720, %v719
  %v726 = vpack.c.b16 %v722, %v721
  %vm731 = vcmask 523264
  %v733 = vsel %vm731, %v693, 0
  %735 = vmatprep.subr.bf16.mxu0 0
  %736 = vmatpush1.bf16.msra.mxu0 0
  %737 = vmatprep.subr.bf16.mxu0 0
  %738 = vmatpush1.bf16.msra.mxu0 0
  %739 = vmatprep.subr.bf16.mxu0 0
  %740 = vmatpush1.bf16.msra.mxu0 0
  %741 = vmatprep.subr.bf16.mxu0 0
  %742 = vmatpush1.bf16.msra.mxu0 0
  %743 = vmatprep.subr.bf16.mxu0 0
  %744 = vmatpush1.bf16.msra.mxu0 %v726
  %745 = vmatprep.subr.bf16.mxu0 0
  %746 = vmatpush1.bf16.msra.mxu0 %v725
  %747 = vmatprep.subr.bf16.mxu0 0
  %748 = vmatpush1.bf16.msra.mxu0 %v724
  %749 = vmatprep.subr.bf16.mxu0 0
  %750 = vmatpush1.bf16.msra.mxu0 %v723
  %751 = vmatprep.subr.bf16.mxu0 0
  %752 = vmatpush2.bf16.msra.mxu0 0
  %753 = vmatprep.subr.bf16.mxu0 0
  %754 = vmatpush2.bf16.msra.mxu0 0
  %755 = vmatprep.subr.bf16.mxu0 0
  %756 = vmatpush2.bf16.msra.mxu0 0
  %757 = vmatprep.subr.bf16.mxu0 0
  %758 = vmatpush2.bf16.msra.mxu0 0
  %759 = vmatprep.subr.bf16.mxu0 0
  %760 = vmatpush2.bf16.msra.mxu0 0
  %761 = vmatprep.subr.bf16.mxu0 0
  %762 = vmatpush2.bf16.msra.mxu0 0
  %763 = vmatprep.subr.bf16.mxu0 0
  %764 = vmatpush2.bf16.msra.mxu0 0
  %765 = vmatprep.subr.bf16.mxu0 0
  %766 = vmatpush2.bf16.msra.mxu0 0
  %767 = vmatprep.mubr.bf16.mxu0 0
  %768 = vmatmul.mubr.bf16.gmra.mxu0 %v733
  %v769 = vpop.f32.mrf.mxu0
  %v770 = vadd.f32 %v706, %v769
  %v771 = vpop.f32.mrf.mxu0
  %v772 = vpop.f32.mrf.mxu0
  %v773 = vpop.f32.mrf.mxu0
  %774 = vdwg.mxu0
  %v775 = vmax.f32 %v770, 0.0
  %v776 = vpack.c.bf16 %v775, %v775
  %v777 = vld [vmem:[%s5] sm:$0xf]
  %v778 = vld [vmem:[%s5 + $0x4] sm:$0xf]
  %v779 = vld [vmem:[%s5 + $0x8] sm:$0xf]
  %v780 = vld [vmem:[%s5 + $0xc] sm:$0xf]
  %v781 = vld [vmem:[%s5 + $0x10] sm:$0xf]
  %v782 = vld [vmem:[%s5 + $0x14] sm:$0xf]
  %v783 = vld [vmem:[%s5 + $0x18] sm:$0xf]
  %v784 = vld [vmem:[%s5 + $0x1c] sm:$0xf]
  %v785 = vld [vmem:[%s5 + $0x20] sm:$0xf]
  %v786 = vld [vmem:[%s5 + $0x24] sm:$0xf]
  %v787 = vld [vmem:[%s5 + $0x28] sm:$0xf]
  %v788 = vld [vmem:[%s5 + $0x2c] sm:$0xf]
  %v789 = vld [vmem:[%s5 + $0x30] sm:$0xf]
  %v790 = vld [vmem:[%s5 + $0x34] sm:$0xf]
  %v791 = vld [vmem:[%s5 + $0x38] sm:$0xf]
  %v792 = vld [vmem:[%s5 + $0x3c] sm:$0xf]
  %v793 = vld [vmem:[%s7 + $0x2] sm:$0x1]
  %v794 = vlaneseq
  %v795 = vshrl.u32 %v794, 7
  %v796 = vsub.s32 0, %v795
  %v797 = vrot.slane %v793, %v796
  %v814 = vunpack.c.l.b16 %v777
  %v815 = vunpack.c.l.b16 %v778
  %v816 = vunpack.c.l.b16 %v779
  %v817 = vunpack.c.l.b16 %v780
  %v818 = vunpack.c.l.b16 %v781
  %v819 = vunpack.c.l.b16 %v782
  %v820 = vunpack.c.l.b16 %v783
  %v821 = vunpack.c.l.b16 %v784
  %v822 = vunpack.c.l.b16 %v785
  %v823 = vunpack.c.l.b16 %v786
  %v824 = vunpack.c.l.b16 %v787
  %v825 = vunpack.c.l.b16 %v788
  %v826 = vunpack.c.l.b16 %v789
  %v827 = vunpack.c.l.b16 %v790
  %v828 = vunpack.c.l.b16 %v791
  %v829 = vunpack.c.l.b16 %v792
  %v830 = vpack.c.b16 %v815, %v814
  %v831 = vpack.c.b16 %v817, %v816
  %v832 = vpack.c.b16 %v819, %v818
  %v833 = vpack.c.b16 %v821, %v820
  %v834 = vpack.c.b16 %v823, %v822
  %v835 = vpack.c.b16 %v825, %v824
  %v836 = vpack.c.b16 %v827, %v826
  %v837 = vpack.c.b16 %v829, %v828
  %846 = vmatprep.subr.bf16.mxu0 0
  %847 = vmatpush1.bf16.msra.mxu0 %v837
  %848 = vmatprep.subr.bf16.mxu0 0
  %849 = vmatpush1.bf16.msra.mxu0 %v836
  %850 = vmatprep.subr.bf16.mxu0 0
  %851 = vmatpush1.bf16.msra.mxu0 %v835
  %852 = vmatprep.subr.bf16.mxu0 0
  %853 = vmatpush1.bf16.msra.mxu0 %v834
  %854 = vmatprep.subr.bf16.mxu0 0
  %855 = vmatpush1.bf16.msra.mxu0 %v833
  %856 = vmatprep.subr.bf16.mxu0 0
  %857 = vmatpush1.bf16.msra.mxu0 %v832
  %858 = vmatprep.subr.bf16.mxu0 0
  %859 = vmatpush1.bf16.msra.mxu0 %v831
  %860 = vmatprep.subr.bf16.mxu0 0
  %861 = vmatpush1.bf16.msra.mxu0 %v830
  %862 = vmatprep.subr.bf16.mxu0 0
  %863 = vmatpush2.bf16.msra.mxu0 0
  %864 = vmatprep.subr.bf16.mxu0 0
  %865 = vmatpush2.bf16.msra.mxu0 0
  %866 = vmatprep.subr.bf16.mxu0 0
  %867 = vmatpush2.bf16.msra.mxu0 0
  %868 = vmatprep.subr.bf16.mxu0 0
  %869 = vmatpush2.bf16.msra.mxu0 0
  %870 = vmatprep.subr.bf16.mxu0 0
  %871 = vmatpush2.bf16.msra.mxu0 0
  %872 = vmatprep.subr.bf16.mxu0 0
  %873 = vmatpush2.bf16.msra.mxu0 0
  %874 = vmatprep.subr.bf16.mxu0 0
  %875 = vmatpush2.bf16.msra.mxu0 0
  %876 = vmatprep.subr.bf16.mxu0 0
  %877 = vmatpush2.bf16.msra.mxu0 0
  %878 = vmatprep.mubr.bf16.mxu0 0
  %879 = vmatmul.mubr.bf16.gmra.mxu0 %v776
  %v880 = vpop.f32.mrf.mxu0
  %v881 = vadd.f32 %v797, %v880
  %v882 = vpop.f32.mrf.mxu0
  %v883 = vpop.f32.mrf.mxu0
  %v884 = vpop.f32.mrf.mxu0
  %885 = vdwg.mxu0
  %v886 = vmax.f32 %v881, 0.0
  %v887 = vpack.c.bf16 %v886, %v886
  %v888 = vld [vmem:[%s6] sm:$0xf]
  %v889 = vld [vmem:[%s6 + $0x4] sm:$0xf]
  %v890 = vld [vmem:[%s6 + $0x8] sm:$0xf]
  %v891 = vld [vmem:[%s6 + $0xc] sm:$0xf]
  %v892 = vld [vmem:[%s6 + $0x10] sm:$0xf]
  %v893 = vld [vmem:[%s6 + $0x14] sm:$0xf]
  %v894 = vld [vmem:[%s6 + $0x18] sm:$0xf]
  %v895 = vld [vmem:[%s6 + $0x1c] sm:$0xf]
  %v896 = vld [vmem:[%s7 + $0x3] sm:$0x1]
  %v897 = vlaneseq
  %v898 = vshrl.u32 %v897, 7
  %v899 = vsub.s32 0, %v898
  %v900 = vrot.slane %v896, %v899
  %v909 = vunpack.c.l.b16 %v888
  %v910 = vunpack.c.l.b16 %v889
  %v911 = vunpack.c.l.b16 %v890
  %v912 = vunpack.c.l.b16 %v891
  %v913 = vunpack.c.l.b16 %v892
  %v914 = vunpack.c.l.b16 %v893
  %v915 = vunpack.c.l.b16 %v894
  %v916 = vunpack.c.l.b16 %v895
  %v917 = vpack.c.b16 %v910, %v909
  %v918 = vpack.c.b16 %v912, %v911
  %v919 = vpack.c.b16 %v914, %v913
  %v920 = vpack.c.b16 %v916, %v915
  %v926 = vsel %vm731, %v887, 0
  %928 = vmatprep.subr.bf16.mxu0 0
  %929 = vmatpush1.bf16.msra.mxu0 0
  %930 = vmatprep.subr.bf16.mxu0 0
  %931 = vmatpush1.bf16.msra.mxu0 0
  %932 = vmatprep.subr.bf16.mxu0 0
  %933 = vmatpush1.bf16.msra.mxu0 0
  %934 = vmatprep.subr.bf16.mxu0 0
  %935 = vmatpush1.bf16.msra.mxu0 0
  %936 = vmatprep.subr.bf16.mxu0 0
  %937 = vmatpush1.bf16.msra.mxu0 %v920
  %938 = vmatprep.subr.bf16.mxu0 0
  %939 = vmatpush1.bf16.msra.mxu0 %v919
  %940 = vmatprep.subr.bf16.mxu0 0
  %941 = vmatpush1.bf16.msra.mxu0 %v918
  %942 = vmatprep.subr.bf16.mxu0 0
  %943 = vmatpush1.bf16.msra.mxu0 %v917
  %944 = vmatprep.subr.bf16.mxu0 0
  %945 = vmatpush2.bf16.msra.mxu0 0
  %946 = vmatprep.subr.bf16.mxu0 0
  %947 = vmatpush2.bf16.msra.mxu0 0
  %948 = vmatprep.subr.bf16.mxu0 0
  %949 = vmatpush2.bf16.msra.mxu0 0
  %950 = vmatprep.subr.bf16.mxu0 0
  %951 = vmatpush2.bf16.msra.mxu0 0
  %952 = vmatprep.subr.bf16.mxu0 0
  %953 = vmatpush2.bf16.msra.mxu0 0
  %954 = vmatprep.subr.bf16.mxu0 0
  %955 = vmatpush2.bf16.msra.mxu0 0
  %956 = vmatprep.subr.bf16.mxu0 0
  %957 = vmatpush2.bf16.msra.mxu0 0
  %958 = vmatprep.subr.bf16.mxu0 0
  %959 = vmatpush2.bf16.msra.mxu0 0
  %960 = vmatprep.mubr.bf16.mxu0 0
  %961 = vmatmul.mubr.bf16.gmra.mxu0 %v926
  %v962 = vpop.f32.mrf.mxu0
  %v963 = vadd.f32 %v900, %v962
  %v964 = vpop.f32.mrf.mxu0
  %v965 = vpop.f32.mrf.mxu0
  %v966 = vpop.f32.mrf.mxu0
  %967 = vdwg.mxu0
  %v968 = vxor.u32 %v963, 2147483648
  %v969 = vmul.f32 %v968, 1.442695
  %v970 = vpow.pop %v969
  %v971 = vadd.f32 %v970, 1.0
  %v972 = vrcp.pop %v971
  %v973 = vmul.f32 1.0, %v972
  %v974 = vlaneseq
  %v975 = vand.u32 %v974, 127
  %vm976 = vcmp.eq.s32.totalorder %v975, 0
  %vm977 = vcmp.eq.s32.totalorder %v975, 1
  %v978 = vsel %vm977, 690.0, 13.0
  %v979 = vsel %vm976, 1.1, %v978
  %v980 = vsel %vm977, 10.0, 15.0
  %v981 = vsel %vm976, 0.2, %v980
  %v982 = vmul.f32 %v973, %v979
  %v983 = vadd.f32 %v982, %v981
  %vm984 = vcmask 23552
  %985 = vst.msk [vmem:[%s8] sm:$0xff] %vm984, %v983
  // Predicated region
  $region34: #{generator_forward.1} parent=0 // pred_check
    _
  $region35: #{generator_forward.1} parent=0 // pred_check_branch
    %987 = sbr.rel (0) target = $region37
  $region36: #{generator_forward.1} parent=0 // pred_region
    _
  $region37: #{generator_forward.1} parent=0 // pred_fallthru
    _
  // Predicated region
  $region38: #{generator_forward.1} parent=0 // pred_check
    _
  $region39: #{generator_forward.1} parent=0 // pred_check_branch
    %989 = sbr.rel (0) target = $region41
  $region40: #{generator_forward.1} parent=0 // pred_region
    _
  $region41: #{generator_forward.1} parent=0 // pred_fallthru
    _

</llo_original>
